<compile_context>
chip_gen: v5e
topology: v5e:2x2
jax: 0.10.0
libtpu: 0.0.40
codegen_flags: <defaults>
</compile_context>

<pallas_src>
import jax
import jax.numpy as jnp
from jax import lax
from jax.experimental import pallas as pl
from jax.experimental.pallas import tpu as pltpu  # noqa: F401  (TPU backend)

# ---------------- model dims (small, consistent with a tiny transformer) ------
B, S, D = 2, 8, 32          # batch, seq len, hidden
BS = B * S                   # flattened tokens
H = 2                        # heads
DH = D // H                  # head dim
F = 64                       # FFN intermediate
VOCAB = 100
LN_EPS = 1e-12

# ---- f32 slab row offsets (lane width 128, every param at lane offset 0) ----
R_BQKV = 0                   # (1, 3D)  fused qkv bias (scale folded into Q part)
R_BO   = 1                   # (1, D)
R_G1   = 2                   # (1, D)
R_B1   = 3                   # (1, D)
R_BFF1 = 4                   # (1, F)
R_BFF2 = 5                   # (1, D)
R_G2   = 6                   # (1, D)
R_B2   = 7                   # (1, D)
R_POS  = 8                   # (BS, D)   pos_emb tiled over batch
R_WORD = R_POS + BS          # (VOCAB, D) word embedding table
F32_ROWS = ((R_WORD + VOCAB + 7) // 8) * 8        # 128 rows

# ---- bf16 slab row offsets (lane width 128) ----
RW_QKV = 0                   # (D, 3D)
RW_O   = D                   # (D, D)
RW_FF1 = 2 * D               # (D, F)
RW_FF2 = 3 * D               # (F, D)
BF_ROWS = 3 * D + F          # 160 (multiple of the 16-row bf16 sublane tile)


def _layernorm(v, g, b):
    mu = jnp.mean(v, axis=-1, keepdims=True)
    var = jnp.mean((v - mu) ** 2, axis=-1, keepdims=True)
    return (v - mu) * jax.lax.rsqrt(var + LN_EPS) * g + b


def encoder_cls_kernel(ids_ref, mask_ref, f32_ref, bf_ref, out_ref):
    """Single invocation: embeddings + one encoder block; output = CLS hidden (B, D)."""
    # ---------------- embedding gather fused in-kernel (exact one-hot f32 matmul) ----
    ids = ids_ref[...]                                                    # (BS, 1) int32
    onehot = jnp.where(
        lax.broadcasted_iota(jnp.int32, (BS, VOCAB), 1) == ids, 1.0, 0.0
    ).astype(jnp.float32)                                                 # (BS, VOCAB)
    word_emb = f32_ref[R_WORD:R_WORD + VOCAB, 0:D]                        # (VOCAB, D) f32
    x = jnp.dot(onehot, word_emb, preferred_element_type=jnp.float32)     # (BS, D) f32
    x = x + f32_ref[R_POS:R_POS + BS, 0:D]                                # + positions
    x_bf = x.astype(jnp.bfloat16)
    x_cls = jnp.concatenate([x[0:1, :], x[S:S + 1, :]], axis=0)           # (B, D) f32 residual

    # ---------------- additive attention bias (block-diag batch + padding mask) -------
    qb = lax.broadcasted_iota(jnp.int32, (B, BS), 0)                      # query batch
    kj = lax.broadcasted_iota(jnp.int32, (B, BS), 1)                      # flattened key index
    rel = kj - qb * S
    same_batch = (rel >= 0) & (rel < S)
    valid = same_batch & (mask_ref[...] > 0.5)                            # (B, BS)
    neg_bias = jnp.where(valid, 0.0, -1e9).astype(jnp.float32)

    # ---------------- fused QKV projection: one (BS,32)x(32,96) MXU push --------------
    w_qkv = bf_ref[RW_QKV:RW_QKV + D, 0:3 * D]                            # (D, 3D) bf16
    b_qkv = f32_ref[R_BQKV:R_BQKV + 1, 0:3 * D]                           # (1, 3D) f32
    qkv = jnp.dot(x_bf, w_qkv, preferred_element_type=jnp.float32) + b_qkv  # (BS, 3D)
    qkv_cls = jnp.concatenate([qkv[0:1, :], qkv[S:S + 1, :]], axis=0)     # (B, 3D) CLS rows

    # ---------------- attention, per head (H=2, static unroll) ------------------------
    o_heads = []
    for h in range(H):
        q_h = qkv_cls[:, h * DH:(h + 1) * DH]                             # (B, DH)  scale pre-folded
        k_h = qkv[:, D + h * DH:D + (h + 1) * DH]                         # (BS, DH)
        v_h = qkv[:, 2 * D + h * DH:2 * D + (h + 1) * DH]                 # (BS, DH)
        s = lax.dot_general(q_h, k_h, (((1,), (1,)), ((), ())),
                            preferred_element_type=jnp.float32)           # (B, BS), no k.T
        s = s + neg_bias
        s = s - jnp.max(s, axis=-1, keepdims=True)
        p = jnp.exp(s)
        # TODO(synk): approx reciprocal (~1e-3 rel err) vs exact divide of a softmax ref.
        p = p * pl.reciprocal(jnp.sum(p, axis=-1, keepdims=True), approx=True)
        o_heads.append(jnp.dot(p, v_h, preferred_element_type=jnp.float32))  # (B, DH)
    o = jnp.concatenate(o_heads, axis=1)                                  # (B, D) in-vreg lane concat

    # ---------------- single output projection + residual + LayerNorm 1 ---------------
    wo = bf_ref[RW_O:RW_O + D, 0:D]                                       # (D, D) bf16
    attn = jnp.dot(o.astype(jnp.bfloat16), wo, preferred_element_type=jnp.float32)
    attn = attn + f32_ref[R_BO:R_BO + 1, 0:D]
    h1 = _layernorm(x_cls + attn,
                    f32_ref[R_G1:R_G1 + 1, 0:D], f32_ref[R_B1:R_B1 + 1, 0:D])   # (B, D) f32

    # ---------------- feed-forward (CLS rows only) -------------------------------------
    w_ff1 = bf_ref[RW_FF1:RW_FF1 + D, 0:F]                                # (D, F) bf16
    w_ff2 = bf_ref[RW_FF2:RW_FF2 + F, 0:D]                                # (F, D) bf16
    ff = jnp.dot(h1.astype(jnp.bfloat16), w_ff1, preferred_element_type=jnp.float32)
    ff = ff + f32_ref[R_BFF1:R_BFF1 + 1, 0:F]
    # TODO(synk): tanh-approx GELU; PyTorch nn.GELU default is the erf form.
    ff = jax.nn.gelu(ff, approximate=True)
    ff = jnp.dot(ff.astype(jnp.bfloat16), w_ff2, preferred_element_type=jnp.float32)
    ff = ff + f32_ref[R_BFF2:R_BFF2 + 1, 0:D]

    # ---------------- residual + LayerNorm 2 -> CLS hidden state -----------------------
    out_ref[...] = _layernorm(h1 + ff,
                              f32_ref[R_G2:R_G2 + 1, 0:D], f32_ref[R_B2:R_B2 + 1, 0:D])


def pack_params(params):
    """Pack all weights/biases into two slabs (done ONCE, outside the forward path)."""
    scale = 1.0 / float(DH) ** 0.5
    # fold 1/sqrt(DH) into the Q columns / bias in f32, THEN cast (avoids double rounding)
    w_qkv = jnp.concatenate([params["wq"] * scale, params["wk"], params["wv"]], axis=1)  # (D, 3D)
    b_qkv = jnp.concatenate([params["bq"] * scale, params["bk"], params["bv"]], axis=1)  # (1, 3D)

    f32 = jnp.zeros((F32_ROWS, 128), jnp.float32)
    f32 = f32.at[R_BQKV, 0:3 * D].set(b_qkv[0])
    f32 = f32.at[R_BO, 0:D].set(params["bo"][0])
    f32 = f32.at[R_G1, 0:D].set(params["g1"][0])
    f32 = f32.at[R_B1, 0:D].set(params["b1"][0])
    f32 = f32.at[R_BFF1, 0:F].set(params["b_ff1"][0])
    f32 = f32.at[R_BFF2, 0:D].set(params["b_ff2"][0])
    f32 = f32.at[R_G2, 0:D].set(params["g2"][0])
    f32 = f32.at[R_B2, 0:D].set(params["b2"][0])
    f32 = f32.at[R_POS:R_POS + BS, 0:D].set(jnp.tile(params["pos_emb"], (B, 1)))
    f32 = f32.at[R_WORD:R_WORD + VOCAB, 0:D].set(params["word_emb"])

    bf = jnp.zeros((BF_ROWS, 128), jnp.bfloat16)
    bf = bf.at[RW_QKV:RW_QKV + D, 0:3 * D].set(w_qkv.astype(jnp.bfloat16))
    bf = bf.at[RW_O:RW_O + D, 0:D].set(params["wo"].astype(jnp.bfloat16))
    bf = bf.at[RW_FF1:RW_FF1 + D, 0:F].set(params["w_ff1"].astype(jnp.bfloat16))
    bf = bf.at[RW_FF2:RW_FF2 + F, 0:D].set(params["w_ff2"].astype(jnp.bfloat16))

    return {"f32_slab": f32, "bf16_slab": bf}


@jax.jit
def base_model_forward(input_ids, attention_mask, packed):
    """Equivalent of BaseModel.forward: transformer(**inputs).last_hidden_state[:, 0, :]."""
    ids_col = input_ids.reshape(BS, 1).astype(jnp.int32)           # (BS, 1) for in-kernel gather
    mask_row = attention_mask.reshape(1, BS).astype(jnp.float32)   # (1, BS) for in-kernel bias

    # Single invocation, no grid: total footprint ~110 KiB, every array a full VMEM
    # block, 4 input DMAs (2 static slabs + 2 tiny per-call arrays) and 1 output DMA.
    return pl.pallas_call(
        encoder_cls_kernel,
        out_shape=jax.ShapeDtypeStruct((B, D), jnp.float32),
    )(ids_col, mask_row, packed["f32_slab"], packed["bf16_slab"])


def init_params(key):
    ks = jax.random.split(key, 12)

    def w(k, shape, scale=0.05):
        return (scale * jax.random.normal(k, shape)).astype(jnp.float32)

    return {
        "word_emb": w(ks[0], (VOCAB, D)),
        "pos_emb":  w(ks[1], (S, D)),
        "wq": w(ks[2], (D, D)), "bq": jnp.zeros((1, D), jnp.float32),
        "wk": w(ks[3], (D, D)), "bk": jnp.zeros((1, D), jnp.float32),
        "wv": w(ks[4], (D, D)), "bv": jnp.zeros((1, D), jnp.float32),
        "wo": w(ks[5], (D, D)), "bo": jnp.zeros((1, D), jnp.float32),
        "g1": jnp.ones((1, D), jnp.float32), "b1": jnp.zeros((1, D), jnp.float32),
        "w_ff1": w(ks[6], (D, F)), "b_ff1": jnp.zeros((1, F), jnp.float32),
        "w_ff2": w(ks[7], (F, D)), "b_ff2": jnp.zeros((1, D), jnp.float32),
        "g2": jnp.ones((1, D), jnp.float32), "b2": jnp.zeros((1, D), jnp.float32),
    }


if __name__ == "__main__":
    key = jax.random.PRNGKey(0)
    pkey, ikey = jax.random.split(key)
    params = init_params(pkey)
    packed = pack_params(params)            # one-time packing, outside the forward

    input_ids = jax.random.randint(ikey, (B, S), 0, VOCAB, dtype=jnp.int32)
    attention_mask = jnp.ones((B, S), jnp.int32).at[1, S - 2:].set(0)  # pad last 2 of row 1

    out = base_model_forward(input_ids, attention_mask, packed)
    out = jax.block_until_ready(out)
    assert out.shape == (B, D) and out.dtype == jnp.float32
    assert bool(jnp.all(jnp.isfinite(out)))
    print("KERNEL_OK")
</pallas_src>

<mosaic_0001>
module attributes {stable_mosaic.version = 11 : i64} {
  func.func @encoder_cls_kernel(%arg0: memref<16x1xi32, #tpu.memory_space<vmem>>, %arg1: memref<1x16xf32, #tpu.memory_space<vmem>>, %arg2: memref<128x128xf32, #tpu.memory_space<vmem>>, %arg3: memref<160x128xbf16, #tpu.memory_space<vmem>>, %arg4: memref<2x32xf32, #tpu.memory_space<vmem>>) attributes {dimension_semantics = [], scalar_prefetch = 0 : i64, scratch_operands = 0 : i64, tpu.core_type = #tpu.core_type<tc>} {
    %c0 = arith.constant 0 : index
    %c0_0 = arith.constant 0 : index
    %0 = vector.load %arg0[%c0, %c0_0] : memref<16x1xi32, #tpu.memory_space<vmem>>, vector<16x1xi32>
    %1 = tpu.iota {dimensions = array<i32: 1>} : vector<16x100xi32>
    %2 = vector.broadcast %0 : vector<16x1xi32> to vector<16x100xi32>
    %3 = arith.cmpi eq, %1, %2 : vector<16x100xi32>
    %cst = arith.constant 1.000000e+00 : f32
    %cst_1 = arith.constant 0.000000e+00 : f32
    %4 = vector.broadcast %cst : f32 to vector<16x100xf32>
    %5 = vector.broadcast %cst_1 : f32 to vector<16x100xf32>
    %6 = arith.select %3, %4, %5 : vector<16x100xi1>, vector<16x100xf32>
    %c24 = arith.constant 24 : index
    %c0_2 = arith.constant 0 : index
    %7 = vector.load %arg2[%c24, %c0_2] : memref<128x128xf32, #tpu.memory_space<vmem>>, vector<100x32xf32>
    %cst_3 = arith.constant dense<0.000000e+00> : vector<16x32xf32>
    %8 = tpu.matmul %6, %7, %cst_3 {dimension_numbers = #tpu.dot_dimension_numbers<[1], [0], [0], [1], [0, 0, 1, 1], [], []>} : vector<16x100xf32>, vector<100x32xf32>, vector<16x32xf32> -> vector<16x32xf32>
    %c8 = arith.constant 8 : index
    %c0_4 = arith.constant 0 : index
    %9 = vector.load %arg2[%c8, %c0_4] : memref<128x128xf32, #tpu.memory_space<vmem>>, vector<16x32xf32>
    %10 = arith.addf %8, %9 : vector<16x32xf32>
    %11 = arith.truncf %10 : vector<16x32xf32> to vector<16x32xbf16>
    %12 = vector.extract_strided_slice %10 {offsets = [0, 0], sizes = [1, 32], strides = [1, 1]} : vector<16x32xf32> to vector<1x32xf32>
    %13 = vector.extract_strided_slice %10 {offsets = [8, 0], sizes = [1, 32], strides = [1, 1]} : vector<16x32xf32> to vector<1x32xf32>
    %14 = tpu.concatenate %12, %13 in 0 : vector<1x32xf32>, vector<1x32xf32> -> vector<2x32xf32>
    %15 = tpu.iota {dimensions = array<i32: 0>} : vector<2x16xi32>
    %16 = tpu.iota {dimensions = array<i32: 1>} : vector<2x16xi32>
    %c8_i32 = arith.constant 8 : i32
    %17 = vector.broadcast %c8_i32 : i32 to vector<2x16xi32>
    %18 = arith.muli %15, %17 : vector<2x16xi32>
    %19 = arith.subi %16, %18 : vector<2x16xi32>
    %c0_i32 = arith.constant 0 : i32
    %20 = vector.broadcast %c0_i32 : i32 to vector<2x16xi32>
    %21 = arith.cmpi sge, %19, %20 : vector<2x16xi32>
    %c8_i32_5 = arith.constant 8 : i32
    %22 = vector.broadcast %c8_i32_5 : i32 to vector<2x16xi32>
    %23 = arith.cmpi slt, %19, %22 : vector<2x16xi32>
    %24 = arith.andi %21, %23 : vector<2x16xi1>
    %c0_6 = arith.constant 0 : index
    %c0_7 = arith.constant 0 : index
    %25 = vector.load %arg1[%c0_6, %c0_7] : memref<1x16xf32, #tpu.memory_space<vmem>>, vector<1x16xf32>
    %cst_8 = arith.constant 5.000000e-01 : f32
    %26 = vector.broadcast %cst_8 : f32 to vector<1x16xf32>
    %27 = arith.cmpf ogt, %25, %26 : vector<1x16xf32>
    %28 = vector.broadcast %27 : vector<1x16xi1> to vector<2x16xi1>
    %29 = arith.andi %24, %28 : vector<2x16xi1>
    %cst_9 = arith.constant 0.000000e+00 : f32
    %cst_10 = arith.constant -1.000000e+09 : f32
    %30 = vector.broadcast %cst_9 : f32 to vector<2x16xf32>
    %31 = vector.broadcast %cst_10 : f32 to vector<2x16xf32>
    %32 = arith.select %29, %30, %31 : vector<2x16xi1>, vector<2x16xf32>
    %c0_11 = arith.constant 0 : index
    %c0_12 = arith.constant 0 : index
    %33 = vector.load %arg3[%c0_11, %c0_12] : memref<160x128xbf16, #tpu.memory_space<vmem>>, vector<32x96xbf16>
    %c0_13 = arith.constant 0 : index
    %c0_14 = arith.constant 0 : index
    %34 = vector.load %arg2[%c0_13, %c0_14] : memref<128x128xf32, #tpu.memory_space<vmem>>, vector<1x96xf32>
    %cst_15 = arith.constant dense<0.000000e+00> : vector<16x96xf32>
    %35 = tpu.matmul %11, %33, %cst_15 {dimension_numbers = #tpu.dot_dimension_numbers<[1], [0], [0], [1], [0, 0, 1, 1], [], []>} : vector<16x32xbf16>, vector<32x96xbf16>, vector<16x96xf32> -> vector<16x96xf32>
    %36 = vector.broadcast %34 : vector<1x96xf32> to vector<16x96xf32>
    %37 = arith.addf %35, %36 : vector<16x96xf32>
    %38 = vector.extract_strided_slice %37 {offsets = [0, 0], sizes = [1, 96], strides = [1, 1]} : vector<16x96xf32> to vector<1x96xf32>
    %39 = vector.extract_strided_slice %37 {offsets = [8, 0], sizes = [1, 96], strides = [1, 1]} : vector<16x96xf32> to vector<1x96xf32>
    %40 = tpu.concatenate %38, %39 in 0 : vector<1x96xf32>, vector<1x96xf32> -> vector<2x96xf32>
    %41 = vector.extract_strided_slice %40 {offsets = [0, 0], sizes = [2, 16], strides = [1, 1]} : vector<2x96xf32> to vector<2x16xf32>
    %42 = vector.extract_strided_slice %37 {offsets = [0, 32], sizes = [16, 16], strides = [1, 1]} : vector<16x96xf32> to vector<16x16xf32>
    %43 = vector.extract_strided_slice %37 {offsets = [0, 64], sizes = [16, 16], strides = [1, 1]} : vector<16x96xf32> to vector<16x16xf32>
    %cst_16 = arith.constant dense<0.000000e+00> : vector<2x16xf32>
    %44 = tpu.matmul %41, %42, %cst_16 {dimension_numbers = #tpu.dot_dimension_numbers<[1], [1], [0], [0], [0, 0, 1, 0], [], []>} : vector<2x16xf32>, vector<16x16xf32>, vector<2x16xf32> -> vector<2x16xf32>
    %45 = arith.addf %44, %32 : vector<2x16xf32>
    %cst_17 = arith.constant dense<0xFF800000> : vector<2xf32>
    %46 = vector.multi_reduction <maximumf>, %45, %cst_17 [1] : vector<2x16xf32> to vector<2xf32>
    %47 = vector.shape_cast %46 : vector<2xf32> to vector<2x1xf32>
    %48 = vector.broadcast %47 : vector<2x1xf32> to vector<2x16xf32>
    %49 = arith.subf %45, %48 : vector<2x16xf32>
    %50 = math.exp %49 : vector<2x16xf32>
    %cst_18 = arith.constant dense<0.000000e+00> : vector<2xf32>
    %51 = vector.multi_reduction <add>, %50, %cst_18 [1] : vector<2x16xf32> to vector<2xf32>
    %52 = vector.shape_cast %51 : vector<2xf32> to vector<2x1xf32>
    %53 = tpu.reciprocal %52 {approx = true} : vector<2x1xf32> -> vector<2x1xf32>
    %54 = vector.broadcast %53 : vector<2x1xf32> to vector<2x16xf32>
    %55 = arith.mulf %50, %54 : vector<2x16xf32>
    %cst_19 = arith.constant dense<0.000000e+00> : vector<2x16xf32>
    %56 = tpu.matmul %55, %43, %cst_19 {dimension_numbers = #tpu.dot_dimension_numbers<[1], [0], [0], [1], [0, 0, 1, 1], [], []>} : vector<2x16xf32>, vector<16x16xf32>, vector<2x16xf32> -> vector<2x16xf32>
    %57 = vector.extract_strided_slice %40 {offsets = [0, 16], sizes = [2, 16], strides = [1, 1]} : vector<2x96xf32> to vector<2x16xf32>
    %58 = vector.extract_strided_slice %37 {offsets = [0, 48], sizes = [16, 16], strides = [1, 1]} : vector<16x96xf32> to vector<16x16xf32>
    %59 = vector.extract_strided_slice %37 {offsets = [0, 80], sizes = [16, 16], strides = [1, 1]} : vector<16x96xf32> to vector<16x16xf32>
    %cst_20 = arith.constant dense<0.000000e+00> : vector<2x16xf32>
    %60 = tpu.matmul %57, %58, %cst_20 {dimension_numbers = #tpu.dot_dimension_numbers<[1], [1], [0], [0], [0, 0, 1, 0], [], []>} : vector<2x16xf32>, vector<16x16xf32>, vector<2x16xf32> -> vector<2x16xf32>
    %61 = arith.addf %60, %32 : vector<2x16xf32>
    %cst_21 = arith.constant dense<0xFF800000> : vector<2xf32>
    %62 = vector.multi_reduction <maximumf>, %61, %cst_21 [1] : vector<2x16xf32> to vector<2xf32>
    %63 = vector.shape_cast %62 : vector<2xf32> to vector<2x1xf32>
    %64 = vector.broadcast %63 : vector<2x1xf32> to vector<2x16xf32>
    %65 = arith.subf %61, %64 : vector<2x16xf32>
    %66 = math.exp %65 : vector<2x16xf32>
    %cst_22 = arith.constant dense<0.000000e+00> : vector<2xf32>
    %67 = vector.multi_reduction <add>, %66, %cst_22 [1] : vector<2x16xf32> to vector<2xf32>
    %68 = vector.shape_cast %67 : vector<2xf32> to vector<2x1xf32>
    %69 = tpu.reciprocal %68 {approx = true} : vector<2x1xf32> -> vector<2x1xf32>
    %70 = vector.broadcast %69 : vector<2x1xf32> to vector<2x16xf32>
    %71 = arith.mulf %66, %70 : vector<2x16xf32>
    %cst_23 = arith.constant dense<0.000000e+00> : vector<2x16xf32>
    %72 = tpu.matmul %71, %59, %cst_23 {dimension_numbers = #tpu.dot_dimension_numbers<[1], [0], [0], [1], [0, 0, 1, 1], [], []>} : vector<2x16xf32>, vector<16x16xf32>, vector<2x16xf32> -> vector<2x16xf32>
    %73 = tpu.concatenate %56, %72 in 1 : vector<2x16xf32>, vector<2x16xf32> -> vector<2x32xf32>
    %c32 = arith.constant 32 : index
    %c0_24 = arith.constant 0 : index
    %74 = vector.load %arg3[%c32, %c0_24] : memref<160x128xbf16, #tpu.memory_space<vmem>>, vector<32x32xbf16>
    %75 = arith.truncf %73 : vector<2x32xf32> to vector<2x32xbf16>
    %cst_25 = arith.constant dense<0.000000e+00> : vector<2x32xf32>
    %76 = tpu.matmul %75, %74, %cst_25 {dimension_numbers = #tpu.dot_dimension_numbers<[1], [0], [0], [1], [0, 0, 1, 1], [], []>} : vector<2x32xbf16>, vector<32x32xbf16>, vector<2x32xf32> -> vector<2x32xf32>
    %c1 = arith.constant 1 : index
    %c0_26 = arith.constant 0 : index
    %77 = vector.load %arg2[%c1, %c0_26] : memref<128x128xf32, #tpu.memory_space<vmem>>, vector<1x32xf32>
    %78 = vector.broadcast %77 : vector<1x32xf32> to vector<2x32xf32>
    %79 = arith.addf %76, %78 : vector<2x32xf32>
    %80 = arith.addf %14, %79 : vector<2x32xf32>
    %c2 = arith.constant 2 : index
    %c0_27 = arith.constant 0 : index
    %81 = vector.load %arg2[%c2, %c0_27] : memref<128x128xf32, #tpu.memory_space<vmem>>, vector<1x32xf32>
    %c3 = arith.constant 3 : index
    %c0_28 = arith.constant 0 : index
    %82 = vector.load %arg2[%c3, %c0_28] : memref<128x128xf32, #tpu.memory_space<vmem>>, vector<1x32xf32>
    %cst_29 = arith.constant dense<0.000000e+00> : vector<2xf32>
    %83 = vector.multi_reduction <add>, %80, %cst_29 [1] : vector<2x32xf32> to vector<2xf32>
    %84 = vector.shape_cast %83 : vector<2xf32> to vector<2x1xf32>
    %cst_30 = arith.constant 3.200000e+01 : f32
    %85 = vector.broadcast %cst_30 : f32 to vector<2x1xf32>
    %86 = arith.divf %84, %85 : vector<2x1xf32>
    %87 = vector.broadcast %86 : vector<2x1xf32> to vector<2x32xf32>
    %88 = arith.subf %80, %87 : vector<2x32xf32>
    %89 = arith.mulf %88, %88 : vector<2x32xf32>
    %cst_31 = arith.constant dense<0.000000e+00> : vector<2xf32>
    %90 = vector.multi_reduction <add>, %89, %cst_31 [1] : vector<2x32xf32> to vector<2xf32>
    %91 = vector.shape_cast %90 : vector<2xf32> to vector<2x1xf32>
    %cst_32 = arith.constant 3.200000e+01 : f32
    %92 = vector.broadcast %cst_32 : f32 to vector<2x1xf32>
    %93 = arith.divf %91, %92 : vector<2x1xf32>
    %94 = vector.broadcast %86 : vector<2x1xf32> to vector<2x32xf32>
    %95 = arith.subf %80, %94 : vector<2x32xf32>
    %cst_33 = arith.constant 9.99999996E-13 : f32
    %96 = vector.broadcast %cst_33 : f32 to vector<2x1xf32>
    %97 = arith.addf %93, %96 : vector<2x1xf32>
    %98 = math.rsqrt %97 : vector<2x1xf32>
    %99 = vector.broadcast %98 : vector<2x1xf32> to vector<2x32xf32>
    %100 = arith.mulf %95, %99 : vector<2x32xf32>
    %101 = vector.broadcast %81 : vector<1x32xf32> to vector<2x32xf32>
    %102 = arith.mulf %100, %101 : vector<2x32xf32>
    %103 = vector.broadcast %82 : vector<1x32xf32> to vector<2x32xf32>
    %104 = arith.addf %102, %103 : vector<2x32xf32>
    %c64 = arith.constant 64 : index
    %c0_34 = arith.constant 0 : index
    %105 = vector.load %arg3[%c64, %c0_34] : memref<160x128xbf16, #tpu.memory_space<vmem>>, vector<32x64xbf16>
    %c96 = arith.constant 96 : index
    %c0_35 = arith.constant 0 : index
    %106 = vector.load %arg3[%c96, %c0_35] : memref<160x128xbf16, #tpu.memory_space<vmem>>, vector<64x32xbf16>
    %107 = arith.truncf %104 : vector<2x32xf32> to vector<2x32xbf16>
    %cst_36 = arith.constant dense<0.000000e+00> : vector<2x64xf32>
    %108 = tpu.matmul %107, %105, %cst_36 {dimension_numbers = #tpu.dot_dimension_numbers<[1], [0], [0], [1], [0, 0, 1, 1], [], []>} : vector<2x32xbf16>, vector<32x64xbf16>, vector<2x64xf32> -> vector<2x64xf32>
    %c4 = arith.constant 4 : index
    %c0_37 = arith.constant 0 : index
    %109 = vector.load %arg2[%c4, %c0_37] : memref<128x128xf32, #tpu.memory_space<vmem>>, vector<1x64xf32>
    %110 = vector.broadcast %109 : vector<1x64xf32> to vector<2x64xf32>
    %111 = arith.addf %108, %110 : vector<2x64xf32>
    %112 = arith.mulf %111, %111 : vector<2x64xf32>
    %113 = arith.mulf %111, %112 : vector<2x64xf32>
    %cst_38 = arith.constant 4.471500e-02 : f32
    %114 = vector.broadcast %cst_38 : f32 to vector<2x64xf32>
    %115 = arith.mulf %114, %113 : vector<2x64xf32>
    %116 = arith.addf %111, %115 : vector<2x64xf32>
    %cst_39 = arith.constant 0.797884583 : f32
    %117 = vector.broadcast %cst_39 : f32 to vector<2x64xf32>
    %118 = arith.mulf %117, %116 : vector<2x64xf32>
    %119 = math.tanh %118 : vector<2x64xf32>
    %cst_40 = arith.constant 1.000000e+00 : f32
    %120 = vector.broadcast %cst_40 : f32 to vector<2x64xf32>
    %121 = arith.addf %120, %119 : vector<2x64xf32>
    %cst_41 = arith.constant 5.000000e-01 : f32
    %122 = vector.broadcast %cst_41 : f32 to vector<2x64xf32>
    %123 = arith.mulf %122, %121 : vector<2x64xf32>
    %124 = arith.mulf %111, %123 : vector<2x64xf32>
    %125 = arith.truncf %124 : vector<2x64xf32> to vector<2x64xbf16>
    %cst_42 = arith.constant dense<0.000000e+00> : vector<2x32xf32>
    %126 = tpu.matmul %125, %106, %cst_42 {dimension_numbers = #tpu.dot_dimension_numbers<[1], [0], [0], [1], [0, 0, 1, 1], [], []>} : vector<2x64xbf16>, vector<64x32xbf16>, vector<2x32xf32> -> vector<2x32xf32>
    %c5 = arith.constant 5 : index
    %c0_43 = arith.constant 0 : index
    %127 = vector.load %arg2[%c5, %c0_43] : memref<128x128xf32, #tpu.memory_space<vmem>>, vector<1x32xf32>
    %128 = vector.broadcast %127 : vector<1x32xf32> to vector<2x32xf32>
    %129 = arith.addf %126, %128 : vector<2x32xf32>
    %130 = arith.addf %104, %129 : vector<2x32xf32>
    %c6 = arith.constant 6 : index
    %c0_44 = arith.constant 0 : index
    %131 = vector.load %arg2[%c6, %c0_44] : memref<128x128xf32, #tpu.memory_space<vmem>>, vector<1x32xf32>
    %c7 = arith.constant 7 : index
    %c0_45 = arith.constant 0 : index
    %132 = vector.load %arg2[%c7, %c0_45] : memref<128x128xf32, #tpu.memory_space<vmem>>, vector<1x32xf32>
    %cst_46 = arith.constant dense<0.000000e+00> : vector<2xf32>
    %133 = vector.multi_reduction <add>, %130, %cst_46 [1] : vector<2x32xf32> to vector<2xf32>
    %134 = vector.shape_cast %133 : vector<2xf32> to vector<2x1xf32>
    %cst_47 = arith.constant 3.200000e+01 : f32
    %135 = vector.broadcast %cst_47 : f32 to vector<2x1xf32>
    %136 = arith.divf %134, %135 : vector<2x1xf32>
    %137 = vector.broadcast %136 : vector<2x1xf32> to vector<2x32xf32>
    %138 = arith.subf %130, %137 : vector<2x32xf32>
    %139 = arith.mulf %138, %138 : vector<2x32xf32>
    %cst_48 = arith.constant dense<0.000000e+00> : vector<2xf32>
    %140 = vector.multi_reduction <add>, %139, %cst_48 [1] : vector<2x32xf32> to vector<2xf32>
    %141 = vector.shape_cast %140 : vector<2xf32> to vector<2x1xf32>
    %cst_49 = arith.constant 3.200000e+01 : f32
    %142 = vector.broadcast %cst_49 : f32 to vector<2x1xf32>
    %143 = arith.divf %141, %142 : vector<2x1xf32>
    %144 = vector.broadcast %136 : vector<2x1xf32> to vector<2x32xf32>
    %145 = arith.subf %130, %144 : vector<2x32xf32>
    %cst_50 = arith.constant 9.99999996E-13 : f32
    %146 = vector.broadcast %cst_50 : f32 to vector<2x1xf32>
    %147 = arith.addf %143, %146 : vector<2x1xf32>
    %148 = math.rsqrt %147 : vector<2x1xf32>
    %149 = vector.broadcast %148 : vector<2x1xf32> to vector<2x32xf32>
    %150 = arith.mulf %145, %149 : vector<2x32xf32>
    %151 = vector.broadcast %131 : vector<1x32xf32> to vector<2x32xf32>
    %152 = arith.mulf %150, %151 : vector<2x32xf32>
    %153 = vector.broadcast %132 : vector<1x32xf32> to vector<2x32xf32>
    %154 = arith.addf %152, %153 : vector<2x32xf32>
    %c0_51 = arith.constant 0 : index
    %c0_52 = arith.constant 0 : index
    %155 = vector.load %arg4[%c0_51, %c0_52] : memref<2x32xf32, #tpu.memory_space<vmem>>, vector<2x32xf32>
    tpu.vector_store %arg4[%c0_51, %c0_52], %154 {strides = array<i32>} : memref<2x32xf32, #tpu.memory_space<vmem>>, vector<2x32xf32>,
    return
  }
}

</mosaic_0001>

<llo_original>
// kernel: base_model_forward.1
$region0: #{base_model_forward.1}
  #allocation0 [shape = 'u32[]', space=smem, size = 0x4, offset = 0x4, fixed_abs, tag = 'smem constant byte address 0x4 - core index']
  #allocation1 [shape = 'u32[72,128]{1,0:T(1,128)}', space=vmem, size = 0x9000, scoped, tag = 'internal scratch']
  %s0 = inlined_call_operand.vmem [shape: s32[16,1], index: 0, kind: input, shape index: {}]
  %s1 = inlined_call_operand.vmem [shape: f32[1,16], index: 1, kind: input, shape index: {}]
  %s2 = inlined_call_operand.hbm [shape: f32[128,128], index: 2, kind: input, shape index: {}]
  %s3 = inlined_call_operand.hbm [shape: bf16[160,128], index: 3, kind: input, shape index: {}]
  %s4 = inlined_call_operand.hbm [shape: f32[2,32], index: 4, kind: output, shape index: {}]
  %s5 = sld [smem:[#allocation0]]
  $region34: #{base_model_forward.1} parent=0
    _
  %s7 = ssub.s32 1, %s5
  %s8 = scalar_select 0, %s7, %s5
  $region1: #{base_model_forward.1} parent=0
    #allocation2 [shape = 'u8[65536]{0}', space=vmem, size = 0x10000, scoped, tag = 'input window, operand 2, single buffered']
    #allocation3 [shape = 's32[1]{0}', space=sflag, size = 0x4, scoped, tag = 'scoped memory for base_model_forward.1']
    #allocation4 [shape = 's32[1]{0}', space=sflag, size = 0x4, scoped, tag = 'scoped memory for base_model_forward.1']
    #allocation5 [shape = 'u8[40960]{0}', space=vmem, size = 0xa000, scoped, tag = 'input window, operand 3, single buffered']
    #allocation6 [shape = 's32[1]{0}', space=sflag, size = 0x4, scoped, tag = 'scoped memory for base_model_forward.1']
    #allocation7 [shape = 'u8[1024]{0}', space=vmem, size = 0x400, scoped, tag = 'output window, operand 0, single buffered']
    %9 = vsyncpa [#allocation3], 0
    %10 = vsyncpa [#allocation6], 0
    %11 = vsyncpa [#allocation4], 0
    // Predicated region
    $region2: #{base_model_forward.1} parent=1 // pred_check
      _
    $region3: #{base_model_forward.1} parent=1 // pred_check_branch
      %13 = sbr.rel (0) target = $region5
    $region4: #{base_model_forward.1} parent=1 // pred_region
      _
    $region5: #{base_model_forward.1} parent=1 // pred_fallthru
      _
    // Predicated region
    $region6: #{base_model_forward.1} parent=1 // pred_check
      _
    $region7: #{base_model_forward.1} parent=1 // pred_check_branch
      %15 = sbr.rel (0) target = $region9
    $region8: #{base_model_forward.1} parent=1 // pred_region
      _
    $region9: #{base_model_forward.1} parent=1 // pred_fallthru
      _
    // Predicated region
    $region10: #{base_model_forward.1} parent=1 // pred_check
      _
    $region11: #{base_model_forward.1} parent=1 // pred_check_branch
      %17 = sbr.rel (0) target = $region13
    $region12: #{base_model_forward.1} parent=1 // pred_region
      %19 = vsyncadd [#allocation3], 0
      %s20 = sshll.u32 %s2, 4
      %s21 = int_to_ptr.hbm [resolvable:$true] %s20
      %s22 = sshll.u32 [#allocation2], 4
      %s23 = int_to_ptr.vmem [resolvable:$true] %s22
      %28 = dma.hbm_to_vmem [thread:$0]  %s21, 2048, %s23, [#allocation3], 128, 128, 8
    $region13: #{base_model_forward.1} parent=1 // pred_fallthru
      _
    // Predicated region
    $region14: #{base_model_forward.1} parent=1 // pred_check
      _
    $region15: #{base_model_forward.1} parent=1 // pred_check_branch
      %30 = sbr.rel (0) target = $region17
    $region16: #{base_model_forward.1} parent=1 // pred_region
      %32 = vsyncadd [#allocation6], 0
      %s33 = sshll.u32 %s3, 4
      %s34 = int_to_ptr.hbm [resolvable:$true] %s33
      %s35 = sshll.u32 [#allocation5], 4
      %s36 = int_to_ptr.vmem [resolvable:$true] %s35
      %41 = dma.hbm_to_vmem [thread:$0]  %s34, 1280, %s36, [#allocation6], 64, 64, 4
    $region17: #{base_model_forward.1} parent=1 // pred_fallthru
      _
    // Predicated region
    $region18: #{base_model_forward.1} parent=1 // pred_check
      _
    $region19: #{base_model_forward.1} parent=1 // pred_check_branch
      %43 = sbr.rel (0) target = $region21
    $region20: #{base_model_forward.1} parent=1 // pred_region
      %45 = dma.done [#allocation3], 2048
    $region21: #{base_model_forward.1} parent=1 // pred_fallthru
      _
    // Predicated region
    $region22: #{base_model_forward.1} parent=1 // pred_check
      _
    $region23: #{base_model_forward.1} parent=1 // pred_check_branch
      %47 = sbr.rel (0) target = $region25
    $region24: #{base_model_forward.1} parent=1 // pred_region
      %49 = dma.done [#allocation6], 1280
    $region25: #{base_model_forward.1} parent=1 // pred_fallthru
      _
    %v51 = vld [vmem:[%s0] sm:$0xff]
    %v52 = vld [vmem:[%s0 + $0x8] sm:$0xff]
    %v53 = vlaneseq
    %v54 = vand.u32 %v53, 127
    %55 = vset.pattern.permute.xlu0 0
    %56 = vperm.xlu0 %55, %v51
    %v57 = vpop.permute.xlu0 %56
    %58 = vset.pattern.permute.xlu0 0
    %59 = vperm.xlu0 %58, %v52
    %v60 = vpop.permute.xlu0 %59
    %vm61 = vcmp.eq.s32.totalorder %v54, %v57
    %vm62 = vcmp.eq.s32.totalorder %v54, %v60
    %v63 = vsel %vm61, 1.0, 0.0
    %v64 = vsel %vm62, 1.0, 0.0
    %v65 = vld [vmem:[#allocation2 + $0x18] sm:$0xff]
    %v66 = vld [vmem:[#allocation2 + $0x20] sm:$0xff]
    %v67 = vld [vmem:[#allocation2 + $0x28] sm:$0xff]
    %v68 = vld [vmem:[#allocation2 + $0x30] sm:$0xff]
    %v69 = vld [vmem:[#allocation2 + $0x38] sm:$0xff]
    %v70 = vld [vmem:[#allocation2 + $0x40] sm:$0xff]
    %v71 = vld [vmem:[#allocation2 + $0x48] sm:$0xff]
    %v72 = vld [vmem:[#allocation2 + $0x50] sm:$0xff]
    %v73 = vld [vmem:[#allocation2 + $0x58] sm:$0xff]
    %v74 = vld [vmem:[#allocation2 + $0x60] sm:$0xff]
    %v75 = vld [vmem:[#allocation2 + $0x68] sm:$0xff]
    %v76 = vld [vmem:[#allocation2 + $0x70] sm:$0xff]
    %v77 = vld [vmem:[#allocation2 + $0x78] sm:$0xf]
    %v78 = vld [vmem:[#allocation2 + $0x8] sm:$0xff]
    %v79 = vld [vmem:[#allocation2 + $0x10] sm:$0xff]
    %vm80 = vcmask 818176
    %v82 = vsel %vm80, %v63, 0
    %v85 = vsel %vm80, %v64, 0
    %vm87 = vcmask 1043456
    %v89 = vsel %vm87, %v77, 0
    %91 = vmatpush.msra.mxu0 0.0
    %92 = vmatpush.msra.mxu0 0.0
    %93 = vmatpush.msra.mxu0 0.0
    %94 = vmatpush.msra.mxu0 %v89
    %95 = vmatpush.msra.mxu0 %v76
    %96 = vmatpush.msra.mxu0 %v75
    %97 = vmatpush.msra.mxu0 %v74
    %98 = vmatpush.msra.mxu0 %v73
    %99 = vmatpush.msra.mxu0 %v72
    %100 = vmatpush.msra.mxu0 %v71
    %101 = vmatpush.msra.mxu0 %v70
    %102 = vmatpush.msra.mxu0 %v69
    %103 = vmatpush.msra.mxu0 %v68
    %104 = vmatpush.msra.mxu0 %v67
    %105 = vmatpush.msra.mxu0 %v66
    %106 = vmatpush.msra.mxu0 %v65
    %107 = vmatmul.f32.gmra.mxu0 %v82
    %v108 = vpop.f32.mrf.mxu0
    %v109 = vadd.f32 %v78, %v108
    %110 = vmatmul.f32.gmra.mxu0 %v85
    %v111 = vpop.f32.mrf.mxu0
    %v112 = vadd.f32 %v79, %v111
    %113 = vdwg.mxu0
    %v114 = vpack.c.bf16 %v112, %v109
    %v116 = vrot.slane %v112, 7
    %vm118 = vcmask 1040384
    %v119 = vsel %vm118, %v109, %v116
    %v120 = vlaneseq
    %v121 = vshrl.u32 %v120, 7
    %v122 = vmul.u32 %v121, 8
    %v123 = vsub.s32 %v54, %v122
    %vm124 = vcmp.ge.s32.totalorder %v123, 0
    %vm125 = vcmp.lt.s32.totalorder %v123, 8
    %vm126 = vmand %vm124, %vm125
    %v127 = vld [vmem:[%s1] sm:$0x1]
    %vm128 = vcmp.gt.f32.partialorder %v127, 0.5
    %v129 = vsel %vm128, 1, 0
    %v130 = vperm.slane %v129, 0
    %vm131 = vcmp.eq.s32.totalorder %v130, 1
    %vm132 = vmand %vm126, %vm131
    %v133 = vsel %vm132, 0.0, -1e+09
    %v134 = vld [vmem:[#allocation5] sm:$0xf]
    %v135 = vld [vmem:[#allocation5 + $0x4] sm:$0xf]
    %v136 = vld [vmem:[#allocation5 + $0x8] sm:$0xf]
    %v137 = vld [vmem:[#allocation5 + $0xc] sm:$0xf]
    %v138 = vld [vmem:[#allocation2] sm:$0x1]
    %v139 = vperm.slane %v138, 0
    %v144 = vunpack.c.l.b16 %v134
    %v145 = vunpack.c.l.b16 %v135
    %v146 = vunpack.c.l.b16 %v136
    %v147 = vunpack.c.l.b16 %v137
    %v148 = vpack.c.b16 %v145, %v144
    %v149 = vpack.c.b16 %v147, %v146
    %vm152 = vcmask 261120
    %v154 = vsel %vm152, %v114, 0
    %156 = vmatpush.bf16.msra.mxu0 0
    %157 = vmatpush.bf16.msra.mxu0 0
    %158 = vmatpush.bf16.msra.mxu0 0
    %159 = vmatpush.bf16.msra.mxu0 0
    %160 = vmatpush.bf16.msra.mxu0 0
    %161 = vmatpush.bf16.msra.mxu0 0
    %162 = vmatpush.bf16.msra.mxu0 %v149
    %163 = vmatpush.bf16.msra.mxu0 %v148
    %164 = vmatmul.bf16.gmra.mxu0 %v154
    %v165 = vpop.f32.mrf.mxu0
    %v166 = vadd.f32 %v139, %v165
    %v167 = vpop.f32.mrf.mxu0
    %v168 = vadd.f32 %v139, %v167
    %169 = vdwg.mxu0
    %v171 = vrot.slane %v168, 7
    %v173 = vsel %vm118, %v166, %v171
    %175 = vrot.lane.b32.xlu0 %v166, 96
    %v176 = vpop.permute.xlu0 %175
    %177 = vrot.lane.b32.xlu0 %v168, 96
    %v178 = vpop.permute.xlu0 %177
    %vm179 = vcmask 130048
    %v181 = vsel %vm179, %v173, 0
    %v183 = vsel %vm179, %v176, 0
    %v185 = vsel %vm179, %v178, 0
    %187 = vmatpush.xpose.msra.mxu0 0.0
    %188 = vmatpush.xpose.msra.mxu0 0.0
    %189 = vmatpush.xpose.msra.mxu0 0.0
    %190 = vmatpush.xpose.msra.mxu0 0.0
    %191 = vmatpush.xpose.msra.mxu0 0.0
    %192 = vmatpush.xpose.msra.mxu0 0.0
    %193 = vmatpush.xpose.msra.mxu0 0.0
    %194 = vmatpush.xpose.msra.mxu0 0.0
    %195 = vmatpush.xpose.msra.mxu0 0.0
    %196 = vmatpush.xpose.msra.mxu0 0.0
    %197 = vmatpush.xpose.msra.mxu0 0.0
    %198 = vmatpush.xpose.msra.mxu0 0.0
    %199 = vmatpush.xpose.msra.mxu0 0.0
    %200 = vmatpush.xpose.msra.mxu0 0.0
    %201 = vmatpush.xpose.msra.mxu0 %v185
    %202 = vmatpush.xpose.msra.mxu0 %v183
    %203 = vmatmul.f32.gmra.mxu0 %v181
    %v204 = vpop.f32.mrf.mxu0
    %v205 = vadd.f32 %v133, %v204
    %206 = vdwg.mxu0
    %vm207 = vcmask 123904
    %v208 = vsel %vm207, %v205, -inf
    %209 = vmax.xlane.f32.xlu0 %v208
    %v210 = vpop.xlane.xlu0 %209
    %v211 = vsub.f32 %v205, %v210
    %v212 = vmul.f32 %v211, 1.442695
    %v213 = vpow.pop %v212
    %v214 = vsel %vm207, %v213, 0.0
    %215 = vadd.xlane.f32.xlu0 %v214
    %v216 = vpop.xlane.xlu0 %215
    %v217 = vrcp.pop %v216
    %v218 = vmul.f32 %v213, %v217
    %219 = vrot.lane.b32.xlu0 %v166, 64
    %v220 = vpop.permute.xlu0 %219
    %221 = vrot.lane.b32.xlu0 %v168, 64
    %v222 = vpop.permute.xlu0 %221
    %v226 = vsel %vm179, %v218, 0
    %228 = vmatpush.msra.mxu0 0.0
    %229 = vmatpush.msra.mxu0 0.0
    %230 = vmatpush.msra.mxu0 0.0
    %231 = vmatpush.msra.mxu0 0.0
    %232 = vmatpush.msra.mxu0 0.0
    %233 = vmatpush.msra.mxu0 0.0
    %234 = vmatpush.msra.mxu0 0.0
    %235 = vmatpush.msra.mxu0 0.0
    %236 = vmatpush.msra.mxu0 0.0
    %237 = vmatpush.msra.mxu0 0.0
    %238 = vmatpush.msra.mxu0 0.0
    %239 = vmatpush.msra.mxu0 0.0
    %240 = vmatpush.msra.mxu0 0.0
    %241 = vmatpush.msra.mxu0 0.0
    %242 = vmatpush.msra.mxu0 %v222
    %243 = vmatpush.msra.mxu0 %v220
    %244 = vmatmul.f32.gmra.mxu0 %v226
    %v245 = vpop.f32.mrf.mxu0
    %v246 = vadd.f32 0.0, %v245
    %247 = vdwg.mxu0
    %248 = vrot.lane.b32.xlu0 %v173, 112
    %v249 = vpop.permute.xlu0 %248
    %250 = vrot.lane.b32.xlu0 %v166, 80
    %v251 = vpop.permute.xlu0 %250
    %252 = vrot.lane.b32.xlu0 %v168, 80
    %v253 = vpop.permute.xlu0 %252
    %v254 = vsel %vm179, %v249, 0
    %v256 = vsel %vm179, %v251, 0
    %v258 = vsel %vm179, %v253, 0
    %260 = vmatpush.xpose.msra.mxu0 0.0
    %261 = vmatpush.xpose.msra.mxu0 0.0
    %262 = vmatpush.xpose.msra.mxu0 0.0
    %263 = vmatpush.xpose.msra.mxu0 0.0
    %264 = vmatpush.xpose.msra.mxu0 0.0
    %265 = vmatpush.xpose.msra.mxu0 0.0
    %266 = vmatpush.xpose.msra.mxu0 0.0
    %267 = vmatpush.xpose.msra.mxu0 0.0
    %268 = vmatpush.xpose.msra.mxu0 0.0
    %269 = vmatpush.xpose.msra.mxu0 0.0
    %270 = vmatpush.xpose.msra.mxu0 0.0
    %271 = vmatpush.xpose.msra.mxu0 0.0
    %272 = vmatpush.xpose.msra.mxu0 0.0
    %273 = vmatpush.xpose.msra.mxu0 0.0
    %274 = vmatpush.xpose.msra.mxu0 %v258
    %275 = vmatpush.xpose.msra.mxu0 %v256
    %276 = vmatmul.f32.gmra.mxu0 %v254
    %v277 = vpop.f32.mrf.mxu0
    %v278 = vadd.f32 %v133, %v277
    %279 = vdwg.mxu0
    %v280 = vsel %vm207, %v278, -inf
    %281 = vmax.xlane.f32.xlu0 %v280
    %v282 = vpop.xlane.xlu0 %281
    %v283 = vsub.f32 %v278, %v282
    %v284 = vmul.f32 %v283, 1.442695
    %v285 = vpow.pop %v284
    %v286 = vsel %vm207, %v285, 0.0
    %287 = vadd.xlane.f32.xlu0 %v286
    %v288 = vpop.xlane.xlu0 %287
    %v289 = vrcp.pop %v288
    %v290 = vmul.f32 %v285, %v289
    %291 = vrot.lane.b32.xlu0 %v166, 48
    %v292 = vpop.permute.xlu0 %291
    %293 = vrot.lane.b32.xlu0 %v168, 48
    %v294 = vpop.permute.xlu0 %293
    %v298 = vsel %vm179, %v290, 0
    %300 = vmatpush.msra.mxu0 0.0
    %301 = vmatpush.msra.mxu0 0.0
    %302 = vmatpush.msra.mxu0 0.0
    %303 = vmatpush.msra.mxu0 0.0
    %304 = vmatpush.msra.mxu0 0.0
    %305 = vmatpush.msra.mxu0 0.0
    %306 = vmatpush.msra.mxu0 0.0
    %307 = vmatpush.msra.mxu0 0.0
    %308 = vmatpush.msra.mxu0 0.0
    %309 = vmatpush.msra.mxu0 0.0
    %310 = vmatpush.msra.mxu0 0.0
    %311 = vmatpush.msra.mxu0 0.0
    %312 = vmatpush.msra.mxu0 0.0
    %313 = vmatpush.msra.mxu0 0.0
    %314 = vmatpush.msra.mxu0 %v294
    %315 = vmatpush.msra.mxu0 %v292
    %316 = vmatmul.f32.gmra.mxu0 %v298
    %v317 = vpop.f32.mrf.mxu0
    %v318 = vadd.f32 0.0, %v317
    %319 = vdwg.mxu0
    %321 = vrot.lane.b32.xlu0 %v318, 16
    %v322 = vpop.permute.xlu0 %321
    %v324 = vsel %vm179, %v246, %v322
    %v325 = vld [vmem:[#allocation5 + $0x10] sm:$0xf]
    %v326 = vld [vmem:[#allocation5 + $0x14] sm:$0xf]
    %v327 = vld [vmem:[#allocation5 + $0x18] sm:$0xf]
    %v328 = vld [vmem:[#allocation5 + $0x1c] sm:$0xf]
    %v329 = vpack.c.bf16 %v324, %v324
    %v330 = vld [vmem:[#allocation2 + $0x1] sm:$0x1]
    %v331 = vperm.slane %v330, 0
    %v336 = vunpack.c.l.b16 %v325
    %v337 = vunpack.c.l.b16 %v326
    %v338 = vunpack.c.l.b16 %v327
    %v339 = vunpack.c.l.b16 %v328
    %v340 = vpack.c.b16 %v337, %v336
    %v341 = vpack.c.b16 %v339, %v338
    %v345 = vsel %vm152, %v329, 0
    %347 = vmatpush.bf16.msra.mxu0 0
    %348 = vmatpush.bf16.msra.mxu0 0
    %349 = vmatpush.bf16.msra.mxu0 0
    %350 = vmatpush.bf16.msra.mxu0 0
    %351 = vmatpush.bf16.msra.mxu0 0
    %352 = vmatpush.bf16.msra.mxu0 0
    %353 = vmatpush.bf16.msra.mxu0 %v341
    %354 = vmatpush.bf16.msra.mxu0 %v340
    %355 = vmatmul.bf16.gmra.mxu0 %v345
    %v356 = vpop.f32.mrf.mxu0
    %v357 = vadd.f32 %v331, %v356
    %v358 = vpop.f32.mrf.mxu0
    %359 = vdwg.mxu0
    %v360 = vadd.f32 %v119, %v357
    %v361 = vld [vmem:[#allocation2 + $0x2] sm:$0x1]
    %v362 = vld [vmem:[#allocation2 + $0x3] sm:$0x1]
    %vm363 = vcmask 254976
    %v364 = vsel %vm363, %v360, 0.0
    %365 = vadd.xlane.f32.xlu0 %v364
    %v366 = vpop.xlane.xlu0 %365
    %v367 = vrcp.pop 32.0
    %v368 = vmul.f32 32.0, %v367
    %v369 = vsub.f32 1.0, %v368
    %v370 = vmul.f32 %v367, %v369
    %v371 = vadd.f32 %v367, %v370
    %vm372 = vweird.f32 %v367
    %v373 = vsel %vm372, %v367, %v371
    %v374 = vmul.f32 %v366, %v373
    %v375 = vsub.f32 %v360, %v374
    %v376 = vmul.f32 %v375, %v375
    %v377 = vsel %vm363, %v376, 0.0
    %378 = vadd.xlane.f32.xlu0 %v377
    %v379 = vpop.xlane.xlu0 %378
    %v380 = vmul.f32 %v379, %v373
    %v381 = vadd.f32 %v380, 1e-12
    %v382 = vrsqrt.pop %v381
    %v383 = vmul.f32 %v382, %v381
    %v384 = vmul.f32 %v383, %v382
    %v385 = vmul.f32 0.5, %v384
    %v386 = vsub.f32 1.5, %v385
    %v387 = vmul.f32 %v382, %v386
    %vm388 = vweird.f32 %v381
    %vm389 = vweird.f32 %v382
    %vm390 = vmor %vm388, %vm389
    %v391 = vsel %vm390, %v382, %v387
    %v392 = vmul.f32 %v375, %v391
    %v393 = vperm.slane %v361, 0
    %v394 = vmul.f32 %v392, %v393
    %v395 = vperm.slane %v362, 0
    %v396 = vadd.f32 %v394, %v395
    %v397 = vld [vmem:[#allocation5 + $0x20] sm:$0xf]
    %v398 = vld [vmem:[#allocation5 + $0x24] sm:$0xf]
    %v399 = vld [vmem:[#allocation5 + $0x28] sm:$0xf]
    %v400 = vld [vmem:[#allocation5 + $0x2c] sm:$0xf]
    %v401 = vld [vmem:[#allocation5 + $0x30] sm:$0xf]
    %v402 = vld [vmem:[#allocation5 + $0x34] sm:$0xf]
    %v403 = vld [vmem:[#allocation5 + $0x38] sm:$0xf]
    %v404 = vld [vmem:[#allocation5 + $0x3c] sm:$0xf]
    %v405 = vld [vmem:[#allocation5 + $0x40] sm:$0xf]
    %v406 = vld [vmem:[#allocation5 + $0x44] sm:$0xf]
    %v407 = vld [vmem:[#allocation5 + $0x48] sm:$0xf]
    %v408 = vld [vmem:[#allocation5 + $0x4c] sm:$0xf]
    %v409 = vpack.c.bf16 %v396, %v396
    %v410 = vld [vmem:[#allocation2 + $0x4] sm:$0x1]
    %v411 = vperm.slane %v410, 0
    %v416 = vunpack.c.l.b16 %v397
    %v417 = vunpack.c.l.b16 %v398
    %v418 = vunpack.c.l.b16 %v399
    %v419 = vunpack.c.l.b16 %v400
    %v420 = vpack.c.b16 %v417, %v416
    %v421 = vpack.c.b16 %v419, %v418
    %v425 = vsel %vm152, %v409, 0
    %427 = vmatpush.bf16.msra.mxu0 0
    %428 = vmatpush.bf16.msra.mxu0 0
    %429 = vmatpush.bf16.msra.mxu0 0
    %430 = vmatpush.bf16.msra.mxu0 0
    %431 = vmatpush.bf16.msra.mxu0 0
    %432 = vmatpush.bf16.msra.mxu0 0
    %433 = vmatpush.bf16.msra.mxu0 %v421
    %434 = vmatpush.bf16.msra.mxu0 %v420
    %435 = vmatmul.bf16.gmra.mxu0 %v425
    %v436 = vpop.f32.mrf.mxu0
    %v437 = vadd.f32 %v411, %v436
    %v438 = vpop.f32.mrf.mxu0
    %439 = vdwg.mxu0
    %v440 = vmul.f32 %v437, %v437
    %v441 = vmul.f32 %v437, %v440
    %v442 = vmul.f32 %v441, 0.044715
    %v443 = vadd.f32 %v437, %v442
    %v444 = vmul.f32 %v443, 0.7978846
    %v445 = vtanh.pop %v444
    %v446 = vadd.f32 %v445, 1.0
    %v447 = vmul.f32 %v446, 0.5
    %v448 = vmul.f32 %v437, %v447
    %v449 = vpack.c.bf16 %v448, %v448
    %v450 = vld [vmem:[#allocation2 + $0x5] sm:$0x1]
    %v451 = vperm.slane %v450, 0
    %v460 = vunpack.c.l.b16 %v401
    %v461 = vunpack.c.l.b16 %v402
    %v462 = vunpack.c.l.b16 %v403
    %v463 = vunpack.c.l.b16 %v404
    %v464 = vunpack.c.l.b16 %v405
    %v465 = vunpack.c.l.b16 %v406
    %v466 = vunpack.c.l.b16 %v407
    %v467 = vunpack.c.l.b16 %v408
    %v468 = vpack.c.b16 %v461, %v460
    %v469 = vpack.c.b16 %v463, %v462
    %v470 = vpack.c.b16 %v465, %v464
    %v471 = vpack.c.b16 %v467, %v466
    %vm476 = vcmask 523264
    %v478 = vsel %vm476, %v449, 0
    %480 = vmatpush.bf16.msra.mxu0 0
    %481 = vmatpush.bf16.msra.mxu0 0
    %482 = vmatpush.bf16.msra.mxu0 0
    %483 = vmatpush.bf16.msra.mxu0 0
    %484 = vmatpush.bf16.msra.mxu0 %v471
    %485 = vmatpush.bf16.msra.mxu0 %v470
    %486 = vmatpush.bf16.msra.mxu0 %v469
    %487 = vmatpush.bf16.msra.mxu0 %v468
    %488 = vmatmul.bf16.gmra.mxu0 %v478
    %v489 = vpop.f32.mrf.mxu0
    %v490 = vadd.f32 %v451, %v489
    %v491 = vpop.f32.mrf.mxu0
    %492 = vdwg.mxu0
    %v493 = vadd.f32 %v396, %v490
    %v494 = vld [vmem:[#allocation2 + $0x6] sm:$0x1]
    %v495 = vld [vmem:[#allocation2 + $0x7] sm:$0x1]
    %v496 = vsel %vm363, %v493, 0.0
    %497 = vadd.xlane.f32.xlu0 %v496
    %v498 = vpop.xlane.xlu0 %497
    %v499 = vmul.f32 %v498, %v373
    %v500 = vsub.f32 %v493, %v499
    %v501 = vmul.f32 %v500, %v500
    %v502 = vsel %vm363, %v501, 0.0
    %503 = vadd.xlane.f32.xlu0 %v502
    %v504 = vpop.xlane.xlu0 %503
    %v505 = vmul.f32 %v504, %v373
    %v506 = vadd.f32 %v505, 1e-12
    %v507 = vrsqrt.pop %v506
    %v508 = vmul.f32 %v507, %v506
    %v509 = vmul.f32 %v508, %v507
    %v510 = vmul.f32 0.5, %v509
    %v511 = vsub.f32 1.5, %v510
    %v512 = vmul.f32 %v507, %v511
    %vm513 = vweird.f32 %v506
    %vm514 = vweird.f32 %v507
    %vm515 = vmor %vm513, %vm514
    %v516 = vsel %vm515, %v507, %v512
    %v517 = vmul.f32 %v500, %v516
    %v518 = vperm.slane %v494, 0
    %v519 = vmul.f32 %v517, %v518
    %v520 = vperm.slane %v495, 0
    %v521 = vadd.f32 %v519, %v520
    %522 = vst.msk [vmem:[#allocation7] sm:$0x3] %vm363, %v521
    // Predicated region
    $region26: #{base_model_forward.1} parent=1 // pred_check
      _
    $region27: #{base_model_forward.1} parent=1 // pred_check_branch
      %524 = sbr.rel (0) target = $region29
    $region28: #{base_model_forward.1} parent=1 // pred_region
      %526 = vsyncadd [#allocation4], 0
      %s528 = sshll.u32 [#allocation7], 4
      %s529 = int_to_ptr.vmem [resolvable:$true] %s528
      %s530 = sshll.u32 %s4, 4
      %s531 = int_to_ptr.hbm [resolvable:$true] %s530
      %533 = dma.vmem_to_hbm [thread:$0]  %s529, 32, %s531, [#allocation4]
    $region29: #{base_model_forward.1} parent=1 // pred_fallthru
      _
    // Predicated region
    $region30: #{base_model_forward.1} parent=1 // pred_check
      _
    $region31: #{base_model_forward.1} parent=1 // pred_check_branch
      %535 = sbr.rel (0) target = $region33
    $region32: #{base_model_forward.1} parent=1 // pred_region
      %537 = dma.done [#allocation4], 32
    $region33: #{base_model_forward.1} parent=1 // pred_fallthru
      _
    %538 = vsyncpa [#allocation3], 1
    %539 = vsyncpa [#allocation6], 1
    %540 = vsyncpa [#allocation4], 1

</llo_original>
